<compile_context>
chip_gen: v5e
topology: v5e:2x2
jax: 0.10.0
libtpu: 0.0.40
codegen_flags: <defaults>
</compile_context>

<pallas_src>
import jax
import jax.numpy as jnp
from jax.experimental import pallas as pl
from jax.experimental.pallas import tpu as pltpu


def _h_sigmoid_kernel(x_ref, o_ref):
    x = x_ref[...]
    # relu6(x + 3) / 6  ==  clamp(x + 3, 0, 6) * (1/6).
    # Python-float constants follow x's dtype (weak typing), so bf16 stays bf16.
    o_ref[...] = (jnp.clip(x + 3.0, 0.0, 6.0) * (1.0 / 6.0)).astype(o_ref.dtype)


def _tpu_gen_params():
    """Return (target_block_bytes, vmem_limit_bytes, min_grid_blocks)."""
    kind = ""
    try:
        kind = jax.devices()[0].device_kind.lower()
    except Exception:
        pass
    if "v7" in kind:
        # 64 MiB VMEM per TC, 2 TCs/chip: tighter per-core budget; keep >= 2
        # row blocks so the parallel grid axis shards across both cores.
        return 3 * 1024 * 1024, 32 * 1024 * 1024, 2
    if "v6" in kind:
        # 128 MiB VMEM, 1.4 TB/s HBM: larger blocks amortize per-step overhead.
        return 4 * 1024 * 1024, 48 * 1024 * 1024, 1
    # v5e (and unknown): ~2 MiB blocks are already at roofline.
    return 2 * 1024 * 1024, 32 * 1024 * 1024, 1


def _launch(x2: jax.Array, *, inplace: bool = False) -> jax.Array:
    """Run the elementwise kernel on a 2-D (rows, cols) slab, cols % 128 == 0
    (or rows == 1 with a full-extent block)."""
    rows, cols = x2.shape
    itemsize = jnp.dtype(x2.dtype).itemsize
    target_bytes, vmem_limit, min_blocks = _tpu_gen_params()

    # Dtype-native sublane tile: 8 for f32, 16 for bf16, 32 for int8/fp8.
    sub = max(8, 32 // itemsize)

    # Aim at ~target_bytes per block, rounded down to the native sublane tile.
    tr = max(target_bytes // (cols * itemsize), sub)
    tr = (tr // sub) * sub

    if tr >= rows:
        if min_blocks > 1 and rows >= 2 * sub:
            # Keep the parallel axis shardable across TensorCores (v7x):
            # split rows roughly in half, rounded up to a sublane tile.
            half = pl.cdiv(pl.cdiv(rows, 2), sub) * sub
            tr = min(half, rows)
        else:
            tr = rows  # full-extent row block; any row count is legal

    grid = (pl.cdiv(rows, tr),)  # partial last block handled by Pallas masking

    total = rows * cols
    cost = pl.CostEstimate(
        flops=4 * total,                       # add + 2 clamps + mul
        transcendentals=0,
        bytes_accessed=2 * total * itemsize,   # one read + one write
    )

    extra = {}
    if inplace:
        # Reuse the input HBM buffer for the output (caller should donate x).
        extra["input_output_aliases"] = {0: 0}

    return pl.pallas_call(
        _h_sigmoid_kernel,
        out_shape=jax.ShapeDtypeStruct((rows, cols), x2.dtype),
        grid_spec=pltpu.PrefetchScalarGridSpec(
            num_scalar_prefetch=0,
            grid=grid,
            in_specs=[pl.BlockSpec((tr, cols), lambda i: (i, 0))],
            out_specs=pl.BlockSpec((tr, cols), lambda i: (i, 0)),
        ),
        compiler_params=pltpu.CompilerParams(
            dimension_semantics=("parallel",),
            vmem_limit_bytes=vmem_limit,
        ),
        cost_estimate=cost,
        **extra,
    )(x2)


_MAX_LANE_COLS = 8192  # cap the lane-dense slab-width search


def h_sigmoid(x: jax.Array, *, inplace: bool = False) -> jax.Array:
    """Elementwise hard-sigmoid: relu6(x + 3) / 6. Same shape/dtype as x."""
    if not jnp.issubdtype(x.dtype, jnp.floating):
        raise TypeError(f"h_sigmoid expects a floating dtype, got {x.dtype}")

    orig_shape = x.shape
    total = 1
    for d in orig_shape:
        total *= int(d)
    if total == 0:
        return x

    # Main path: widest multiple-of-128 divisor of `total` (up to the cap)
    # gives a lane-dense 2-D slab with no padding at all.
    best_c = 0
    c = 128
    cap = min(total, _MAX_LANE_COLS)
    while c <= cap:
        if total % c == 0:
            best_c = c
        c += 128
    if best_c:
        out2 = _launch(x.reshape(total // best_c, best_c), inplace=inplace)
        return out2.reshape(orig_shape)

    # Fallback (total not a multiple of 128): no pad/slice round trip.
    # Kernel handles the largest multiple-of-128 prefix; the <128-element
    # tail is finished with plain jnp.
    flat = x.reshape(-1)
    main = (total // 128) * 128
    tail_out = jnp.clip(flat[main:] + 3.0, 0.0, 6.0) * (1.0 / 6.0)
    if main == 0:
        return tail_out.reshape(orig_shape)
    main_out = _launch(flat[:main].reshape(main // 128, 128)).reshape(-1)
    return jnp.concatenate([main_out, tail_out.astype(main_out.dtype)]).reshape(
        orig_shape
    )


def h_sigmoid_ref(x):
    return jnp.clip(x + 3.0, 0.0, 6.0) / 6.0


if __name__ == "__main__":
    key = jax.random.PRNGKey(0)
    # NCHW input, small shape consistent with typical conv activations.
    x = jax.random.normal(key, (2, 4, 16, 16), dtype=jnp.float32) * 4.0

    y = h_sigmoid(x)
    y = jax.block_until_ready(y)

    y_ref = h_sigmoid_ref(x)
    assert y.shape == x.shape and y.dtype == x.dtype
    assert jnp.allclose(y, y_ref, atol=1e-6, rtol=1e-6), "mismatch vs reference"

    # Also exercise the odd-size fallback path (prefix kernel + jnp tail).
    x_odd = jax.random.normal(jax.random.PRNGKey(1), (3, 7, 13), dtype=jnp.float32)
    y_odd = jax.block_until_ready(h_sigmoid(x_odd))
    assert jnp.allclose(y_odd, h_sigmoid_ref(x_odd), atol=1e-6, rtol=1e-6)

    print("KERNEL_OK")
</pallas_src>

<mosaic_0001>
module attributes {stable_mosaic.version = 11 : i64} {
  func.func @_h_sigmoid_kernel(%arg0: i32, %arg1: memref<1x2048xf32, #tpu.memory_space<vmem>>, %arg2: memref<1x2048xf32, #tpu.memory_space<vmem>>) attributes {dimension_semantics = [#tpu.dimension_semantics<parallel>], iteration_bounds = array<i64: 1>, scalar_prefetch = 0 : i64, scratch_operands = 0 : i64, tpu.core_type = #tpu.core_type<tc>, window_params = [{transform_indices = @transform_0, window_bounds = array<i64: 1, 2048>}, {transform_indices = @transform_1, window_bounds = array<i64: 1, 2048>}]} {
    %c0 = arith.constant 0 : index
    %c0_0 = arith.constant 0 : index
    %0 = vector.load %arg1[%c0, %c0_0] : memref<1x2048xf32, #tpu.memory_space<vmem>>, vector<1x2048xf32>
    %cst = arith.constant 3.000000e+00 : f32
    %1 = vector.broadcast %cst : f32 to vector<1x2048xf32>
    %2 = arith.addf %0, %1 : vector<1x2048xf32>
    %cst_1 = arith.constant 0.000000e+00 : f32
    %cst_2 = arith.constant 6.000000e+00 : f32
    %3 = vector.broadcast %cst_1 : f32 to vector<1x2048xf32>
    %4 = arith.maximumf %3, %2 : vector<1x2048xf32>
    %5 = vector.broadcast %cst_2 : f32 to vector<1x2048xf32>
    %6 = arith.minimumf %5, %4 : vector<1x2048xf32>
    %cst_3 = arith.constant 0.166666672 : f32
    %7 = vector.broadcast %cst_3 : f32 to vector<1x2048xf32>
    %8 = arith.mulf %6, %7 : vector<1x2048xf32>
    %c0_4 = arith.constant 0 : index
    %c0_5 = arith.constant 0 : index
    %9 = vector.load %arg2[%c0_4, %c0_5] : memref<1x2048xf32, #tpu.memory_space<vmem>>, vector<1x2048xf32>
    tpu.vector_store %arg2[%c0_4, %c0_5], %8 {strides = array<i32>} : memref<1x2048xf32, #tpu.memory_space<vmem>>, vector<1x2048xf32>,
    return
  }
  func.func @transform_0(%arg0: i32) -> (i32, i32) {
    %c0_i32 = arith.constant 0 : i32
    %c0_i32_0 = arith.constant 0 : i32
    return %arg0, %c0_i32 : i32, i32
  }
  func.func @transform_1(%arg0: i32) -> (i32, i32) {
    %c0_i32 = arith.constant 0 : i32
    %c0_i32_0 = arith.constant 0 : i32
    return %arg0, %c0_i32 : i32, i32
  }
}

</mosaic_0001>

<llo_original>
// kernel: tpu_custom_call.1
$region0: #{tpu_custom_call.1}
  #allocation0 [shape = 'u32[]', space=smem, size = 0x4, offset = 0x4, fixed_abs, tag = 'smem constant byte address 0x4 - core index']
  #allocation1 [shape = 'u32[72,128]{1,0:T(1,128)}', space=vmem, size = 0x9000, scoped, tag = 'internal scratch']
  %s0 = inlined_call_operand.hbm [shape: f32[1,2048], index: 0, kind: input, shape index: {}]
  %s1 = inlined_call_operand.hbm [shape: f32[1,2048], index: 1, kind: output, shape index: {}]
  %s2 = sld [smem:[#allocation0]]
  $region18: #{tpu_custom_call.1} parent=0
    _
  %s4 = ssub.s32 1, %s2
  %s5 = scalar_select 0, %s4, %s2
  $region1: #{tpu_custom_call.1} parent=0
    #allocation2 [shape = 'u8[8192]{0}', space=vmem, size = 0x2000, scoped, tag = 'input window, operand 0, single buffered']
    #allocation3 [shape = 's32[1]{0}', space=sflag, size = 0x4, scoped, tag = 'scoped memory for tpu_custom_call.1']
    #allocation4 [shape = 's32[1]{0}', space=sflag, size = 0x4, scoped, tag = 'scoped memory for tpu_custom_call.1']
    #allocation5 [shape = 'u8[8192]{0}', space=vmem, size = 0x2000, scoped, tag = 'output window, operand 0, single buffered']
    %6 = vsyncpa [#allocation3], 0
    %7 = vsyncpa [#allocation4], 0
    // Predicated region
    $region2: #{tpu_custom_call.1} parent=1 // pred_check
      _
    $region3: #{tpu_custom_call.1} parent=1 // pred_check_branch
      %9 = sbr.rel (0) target = $region5
    $region4: #{tpu_custom_call.1} parent=1 // pred_region
      %11 = vsyncadd [#allocation3], 0
      %s13 = sshll.u32 %s0, 4
      %s14 = int_to_ptr.hbm [resolvable:$true] %s13
      %s15 = sshll.u32 [#allocation2], 4
      %s16 = int_to_ptr.vmem [resolvable:$true] %s15
      %18 = dma.hbm_to_vmem [thread:$0]  %s14, 256, %s16, [#allocation3]
    $region5: #{tpu_custom_call.1} parent=1 // pred_fallthru
      _
    // Predicated region
    $region6: #{tpu_custom_call.1} parent=1 // pred_check
      _
    $region7: #{tpu_custom_call.1} parent=1 // pred_check_branch
      %20 = sbr.rel (0) target = $region9
    $region8: #{tpu_custom_call.1} parent=1 // pred_region
      %22 = dma.done [#allocation3], 256
    $region9: #{tpu_custom_call.1} parent=1 // pred_fallthru
      _
    %v23 = vld [vmem:[#allocation2] sm:$0xff]
    %v24 = vld [vmem:[#allocation2 + $0x8] sm:$0xff]
    %v25 = vadd.f32 %v23, 3.0
    %v26 = vadd.f32 %v24, 3.0
    %v27 = vmax.f32 %v25, 0.0
    %v28 = vmax.f32 %v26, 0.0
    %v29 = vmin.f32 %v27, 6.0
    %v30 = vmin.f32 %v28, 6.0
    %v31 = vmul.f32 %v29, 0.16666667
    %v32 = vmul.f32 %v30, 0.16666667
    %33 = vst [vmem:[#allocation5] sm:$0xff] %v31
    %34 = vst [vmem:[#allocation5 + $0x8] sm:$0xff] %v32
    // Predicated region
    $region10: #{tpu_custom_call.1} parent=1 // pred_check
      _
    $region11: #{tpu_custom_call.1} parent=1 // pred_check_branch
      %36 = sbr.rel (0) target = $region13
    $region12: #{tpu_custom_call.1} parent=1 // pred_region
      %38 = vsyncadd [#allocation4], 0
      %s40 = sshll.u32 [#allocation5], 4
      %s41 = int_to_ptr.vmem [resolvable:$true] %s40
      %s42 = sshll.u32 %s1, 4
      %s43 = int_to_ptr.hbm [resolvable:$true] %s42
      %45 = dma.vmem_to_hbm [thread:$0]  %s41, 256, %s43, [#allocation4]
    $region13: #{tpu_custom_call.1} parent=1 // pred_fallthru
      _
    // Predicated region
    $region14: #{tpu_custom_call.1} parent=1 // pred_check
      _
    $region15: #{tpu_custom_call.1} parent=1 // pred_check_branch
      %47 = sbr.rel (0) target = $region17
    $region16: #{tpu_custom_call.1} parent=1 // pred_region
      %49 = dma.done [#allocation4], 256
    $region17: #{tpu_custom_call.1} parent=1 // pred_fallthru
      _
    %50 = vsyncpa [#allocation3], 1
    %51 = vsyncpa [#allocation4], 1

</llo_original>
